<compile_context>
chip_gen: v7x
topology: tpu7x:2x2x1
jax: 0.10.0
libtpu: 0.0.40
codegen_flags: <defaults>
</compile_context>

<pallas_src>
import functools

import jax
import jax.numpy as jnp
from jax.experimental import pallas as pl
from jax.experimental.pallas import tpu as pltpu


_ROW_SUB = 8                       # rows processed per inner working tile
_DOUBLING_WORKSET_BYTES = 96 << 10  # cap for register-resident doubling (~24 vregs)


def _loop(count, body, step, align):
    """Run body(start) for start = 0, step, ..., (count-1)*step.

    Tiny trip counts unroll statically (all-static offsets); larger counts use
    a fori_loop so code size / compile time stay bounded (perf-review item).
    `step` must be a multiple of `align` so the pl.multiple_of hint is truthful.
    """
    if count <= 0:
        return
    if count <= 2:
        for i in range(count):
            body(i * step)
        return

    def fbody(i, carry):
        body(pl.multiple_of(i * step, align))
        return carry

    jax.lax.fori_loop(0, count, fbody, None)


def _ts_min_kernel(x_ref, o_ref, *, win, lane_chunk, row_sub):
    # x_ref: (rows, S)   rows (B*F) on sublanes, time on lanes
    # o_ref: (rows, cw)  contiguous sliding min: o[r, j] = min_k x[r, j+k]
    rows = o_ref.shape[0]
    cw = o_ref.shape[1]

    def sliding_min(v):
        # Doubling sliding-min along lanes: ceil(log2(win)) VPU passes, shifts
        # are static lane-offset slices of a register value (XLU slot).
        covered = 1
        while covered < win:
            step = min(covered, win - covered)
            w = v.shape[1]
            v = jnp.minimum(v[:, : w - step], v[:, step:])
            covered += step
        return v

    def do_chunk(r0, r_sz, c0, c_sz):
        span = c_sz + win - 1
        if 2 * 4 * r_sz * span <= _DOUBLING_WORKSET_BYTES:
            v = sliding_min(x_ref[pl.ds(r0, r_sz), pl.ds(c0, span)])
        else:
            # TODO(synk): van Herk / Gil-Werman via VMEM scratch for very large
            # windows; this O(win)-load fallback is correct but vld-bound.
            def k_body(k, acc):
                return jnp.minimum(acc,
                                   x_ref[pl.ds(r0, r_sz), pl.ds(c0 + k, c_sz)])

            v = jax.lax.fori_loop(1, win, k_body,
                                  x_ref[pl.ds(r0, r_sz), pl.ds(c0, c_sz)])
        o_ref[pl.ds(r0, r_sz), pl.ds(c0, c_sz)] = v

    n_full_c, rem_c = divmod(cw, lane_chunk)
    n_full_r, rem_r = divmod(rows, row_sub)

    def rows_pass(r0, r_sz):
        _loop(n_full_c, lambda c0: do_chunk(r0, r_sz, c0, lane_chunk),
              lane_chunk, 128)
        if rem_c:
            do_chunk(r0, r_sz, n_full_c * lane_chunk, rem_c)

    _loop(n_full_r, lambda r0: rows_pass(r0, row_sub), row_sub, 8)
    if rem_r:
        rows_pass(n_full_r * row_sub, rem_r)


def _vmem_budget_bytes():
    """Generation-aware per-block VMEM budget (with plenty of headroom)."""
    try:
        cap = int(pltpu.get_tpu_info().vmem_capacity_bytes)
    except Exception:
        cap = 64 << 20  # most-constrained case (v7x per-core physical)
    return max(8 << 20, min(cap // 3, 48 << 20))


def _pick_row_tile(R, S, cw):
    """Rows (B*F) per grid step.

    Multiple of 8 (or full extent), double-buffered f32 blocks within the VMEM
    budget, and capped so the grid has >= 2 steps when R allows (v7x megacore
    sharding + DMA/compute pipelining).  Returns (row_tile, vmem_limit_bytes).
    """
    per_row = 2 * 4 * (S + cw)                # double-buffered f32 in + out
    budget = _vmem_budget_bytes()
    cap_rows = max(8, (budget // per_row) // 8 * 8)
    tile = min(R, cap_rows, 2048)
    if R > 8:                                  # prefer >=2 grid steps
        tile = min(tile, max(8, (((R + 1) // 2) + 7) // 8 * 8))
    if tile < R:
        tile = max(8, (tile // 8) * 8)         # (8,128) rule when not full extent
    needed = per_row * tile + (4 << 20)
    vmem_limit = int(min(max(needed, 16 << 20), 100 << 20))
    return int(tile), vmem_limit


def _pick_lane_chunk(win):
    """Output lanes per inner working tile (multiple of 128), chosen so the
    doubling working set (2 copies of (8, chunk+win-1) f32) avoids spills."""
    max_span = _DOUBLING_WORKSET_BYTES // (2 * 4 * _ROW_SUB)
    fit = ((max_span - (win - 1)) // 128) * 128
    if fit < 128:
        return 128                             # kernel falls back to O(win) path
    return int(min(512, fit))


@functools.partial(jax.jit, static_argnums=(1, 2))
def ts_min(x, min_window, stride):
    """x: (B, F, S) -> (B, F, out_S) float32, matching TsMin.forward."""
    b, f, s = x.shape
    if min_window <= 0 or stride <= 0:
        raise ValueError("min_window and stride must be positive")
    out_seq = (s - min_window) // stride + 1
    if out_seq <= 0:
        raise ValueError(
            f"seq_length={s} is too short for min_window={min_window}")

    R = b * f
    # Width of the contiguous (stride-1) sliding min actually needed.
    cw = (out_seq - 1) * stride + 1

    # Free reshape: rows on sublanes, time on lanes.  (Output forced to f32 to
    # match torch.zeros in the reference module.)
    xt = x.astype(jnp.float32).reshape(R, s)

    row_tile, vmem_limit = _pick_row_tile(R, s, cw)
    lane_chunk = _pick_lane_chunk(min_window)

    kernel = functools.partial(_ts_min_kernel, win=min_window,
                               lane_chunk=lane_chunk, row_sub=_ROW_SUB)

    levels = max(0, min_window - 1).bit_length()     # ~ceil(log2(win))
    cost = pl.CostEstimate(
        flops=R * cw * max(levels, 1),
        transcendentals=0,
        bytes_accessed=4 * R * (s + cw))

    contig = pl.pallas_call(
        kernel,
        out_shape=jax.ShapeDtypeStruct((R, cw), jnp.float32),
        grid=(pl.cdiv(R, row_tile),),
        in_specs=[pl.BlockSpec((row_tile, s), lambda i: (i, 0))],
        out_specs=pl.BlockSpec((row_tile, cw), lambda i: (i, 0)),
        compiler_params=pltpu.CompilerParams(
            dimension_semantics=("parallel",),       # megacore-shardable
            vmem_limit_bytes=vmem_limit),
        cost_estimate=cost,
    )(xt)

    # Strided downselect only when stride > 1 (tiny XLA op on the reduced
    # array; far cheaper than the transposes it replaces).
    out2d = contig if stride == 1 else contig[:, ::stride]
    return out2d.reshape(b, f, out_seq)


def _reference(x, min_window, stride):
    b, f, s = x.shape
    out_seq = (s - min_window) // stride + 1
    cols = []
    for t in range(out_seq):
        start = t * stride
        cols.append(jnp.min(x[:, :, start:start + min_window], axis=2))
    return jnp.stack(cols, axis=2)


if __name__ == "__main__":
    key = jax.random.PRNGKey(0)

    # Case 1: the module's small demo shape (batch=2, features=4, seq=16).
    b, f, s = 2, 4, 16
    min_window, stride = 4, 2          # -> out_seq_length = (16 - 4) // 2 + 1 = 7
    x = jax.random.normal(key, (b, f, s), dtype=jnp.float32)

    out = jax.block_until_ready(ts_min(x, min_window, stride))
    ref = _reference(x, min_window, stride)
    assert out.shape == (b, f, (s - min_window) // stride + 1)
    assert out.dtype == jnp.float32
    assert jnp.allclose(out, ref, atol=1e-6, rtol=1e-6)

    # Case 2: still small, but exercises a multi-step grid, the in-kernel
    # fori row loop and the stride>1 downselect.
    b2, f2, s2 = 8, 8, 64
    x2 = jax.random.normal(jax.random.PRNGKey(0), (b2, f2, s2),
                           dtype=jnp.float32)
    out2 = jax.block_until_ready(ts_min(x2, 5, 3))
    ref2 = _reference(x2, 5, 3)
    assert out2.shape == ref2.shape
    assert jnp.allclose(out2, ref2, atol=1e-6, rtol=1e-6)

    print("KERNEL_OK")
</pallas_src>

<mosaic_0001>
module attributes {stable_mosaic.version = 11 : i64} {
  func.func @_ts_min_kernel(%arg0: i32, %arg1: memref<8x16xf32, #tpu.memory_space<vmem>>, %arg2: memref<8x13xf32, #tpu.memory_space<vmem>>) attributes {dimension_semantics = [#tpu.dimension_semantics<parallel>], iteration_bounds = array<i64: 1>, scalar_prefetch = 0 : i64, scratch_operands = 0 : i64, tpu.core_type = #tpu.core_type<tc>, window_params = [{transform_indices = @transform_0, window_bounds = array<i64: 8, 16>}, {transform_indices = @transform_1, window_bounds = array<i64: 8, 13>}]} {
    %c0 = arith.constant 0 : index
    %c0_0 = arith.constant 0 : index
    %0 = vector.load %arg1[%c0, %c0_0] : memref<8x16xf32, #tpu.memory_space<vmem>>, vector<8x16xf32>
    %1 = vector.extract_strided_slice %0 {offsets = [0, 0], sizes = [8, 15], strides = [1, 1]} : vector<8x16xf32> to vector<8x15xf32>
    %2 = vector.extract_strided_slice %0 {offsets = [0, 1], sizes = [8, 15], strides = [1, 1]} : vector<8x16xf32> to vector<8x15xf32>
    %3 = arith.minimumf %1, %2 : vector<8x15xf32>
    %4 = vector.extract_strided_slice %3 {offsets = [0, 0], sizes = [8, 13], strides = [1, 1]} : vector<8x15xf32> to vector<8x13xf32>
    %5 = vector.extract_strided_slice %3 {offsets = [0, 2], sizes = [8, 13], strides = [1, 1]} : vector<8x15xf32> to vector<8x13xf32>
    %6 = arith.minimumf %4, %5 : vector<8x13xf32>
    %c0_1 = arith.constant 0 : index
    %c0_2 = arith.constant 0 : index
    %7 = vector.load %arg2[%c0_1, %c0_2] : memref<8x13xf32, #tpu.memory_space<vmem>>, vector<8x13xf32>
    tpu.vector_store %arg2[%c0_1, %c0_2], %6 {strides = array<i32>} : memref<8x13xf32, #tpu.memory_space<vmem>>, vector<8x13xf32>,
    return
  }
  func.func @transform_0(%arg0: i32) -> (i32, i32) {
    %c0_i32 = arith.constant 0 : i32
    %c0_i32_0 = arith.constant 0 : i32
    return %arg0, %c0_i32 : i32, i32
  }
  func.func @transform_1(%arg0: i32) -> (i32, i32) {
    %c0_i32 = arith.constant 0 : i32
    %c0_i32_0 = arith.constant 0 : i32
    return %arg0, %c0_i32 : i32, i32
  }
}

</mosaic_0001>

<llo_original>
// kernel: ts_min.1
$region0: #{ts_min.1}
  #allocation0 [shape = 'u32[]', space=smem, size = 0x4, offset = 0x4, fixed_abs, tag = 'smem constant byte address 0x4 - core index']
  #allocation1 [shape = 'u32[144,128]{1,0:T(1,128)}', space=vmem, size = 0x12000, scoped, tag = 'internal scratch']
  %s0 = inlined_call_operand.hbm [shape: f32[8,16], index: 0, kind: input, shape index: {}]
  %s1 = inlined_call_operand.vmem [shape: f32[8,13], index: 1, kind: output, shape index: {}]
  %s2 = sld [smem:[#allocation0]]
  $region18: #{ts_min.1} parent=0
    _
  %s4 = ssub.s32 1, %s2
  %s5 = scalar_select 0, %s4, %s2
  $region1: #{ts_min.1} parent=0
    #allocation2 [shape = 'u8[4096]{0}', space=vmem, size = 0x1000, scoped, tag = 'input window, operand 0, single buffered']
    #allocation3 [shape = 's32[1]{0}', space=sflag, size = 0x4, scoped, tag = 'scoped memory for ts_min.1']
    %6 = vsyncpa [#allocation3], 0
    // Predicated region
    $region2: #{ts_min.1} parent=1 // pred_check
      _
    $region3: #{ts_min.1} parent=1 // pred_check_branch
      %8 = sbr.rel (0) target = $region5
    $region4: #{ts_min.1} parent=1 // pred_region
      %s10 = ssub.s32 128, 128
      %11 = vsyncadd [#allocation3], %s10
      %s13 = sshll.u32 [#allocation2], 4
      %s14 = int_to_ptr.vmem [resolvable:$true] %s13
      %16 = dma.hbm_to_vmem [thread:$0]  %s0, 128, %s14, [#allocation3]
    $region5: #{ts_min.1} parent=1 // pred_fallthru
      _
    // Predicated region
    $region6: #{ts_min.1} parent=1 // pred_check
      _
    $region7: #{ts_min.1} parent=1 // pred_check_branch
      %18 = sbr.rel (0) target = $region9
    $region8: #{ts_min.1} parent=1 // pred_region
      %19 = dma.done [#allocation3], 128
    $region9: #{ts_min.1} parent=1 // pred_fallthru
      _
    %v20 = vld [vmem:[#allocation2] sm:$0xff]
    %22 = vrot.lane.b32.xlu0 %v20, 127
    %v23 = vpop.permute.xlu0 %22
    %v25 = vmin.f32 %v20, %v23
    %27 = vrot.lane.b32.xlu0 %v25, 126
    %v28 = vpop.permute.xlu0 %27
    %v30 = vmin.f32 %v25, %v28
    %vm31 = vcmask 105472
    %32 = vst.msk [vmem:[%s1] sm:$0xff] %vm31, %v30
    // Predicated region
    $region10: #{ts_min.1} parent=1 // pred_check
      _
    $region11: #{ts_min.1} parent=1 // pred_check_branch
      %34 = sbr.rel (0) target = $region13
    $region12: #{ts_min.1} parent=1 // pred_region
      _
    $region13: #{ts_min.1} parent=1 // pred_fallthru
      _
    // Predicated region
    $region14: #{ts_min.1} parent=1 // pred_check
      _
    $region15: #{ts_min.1} parent=1 // pred_check_branch
      %36 = sbr.rel (0) target = $region17
    $region16: #{ts_min.1} parent=1 // pred_region
      _
    $region17: #{ts_min.1} parent=1 // pred_fallthru
      _
    %37 = vsyncpa [#allocation3], 1

</llo_original>
